<compile_context>
chip_gen: v6e
topology: v6e:2x2x1
jax: 0.10.0
libtpu: 0.0.40
codegen_flags: <defaults>
</compile_context>

<pallas_src>
import jax
import jax.numpy as jnp
from jax.experimental import pallas as pl
from jax.experimental.pallas import tpu as pltpu

_LANE = 128
_LANE_CAP = 2048                         # max lane width for the 2D view
_SMALL_BYPASS_BYTES = 256 * 1024         # below this, plain XLA add wins
_VMEM_LIMIT_BYTES = 48 * 1024 * 1024     # explicit scoped-VMEM budget


def _add_kernel(x_ref, y_ref, o_ref):
    # Elementwise add on the VPU over one (tr, LW) tile.
    o_ref[...] = x_ref[...] + y_ref[...]


def _choose_lane_width(n):
    """Largest multiple of 128 that divides n, capped at _LANE_CAP (0 if none)."""
    start = min(_LANE_CAP, (n // _LANE) * _LANE)
    for cand in range(start, 0, -_LANE):
        if n % cand == 0:
            return cand
    return 0


def _target_tile_bytes():
    """Per-stream tile target: ~4 MiB everywhere, ~5 MiB on v7x-class chips."""
    try:
        info = pltpu.get_tpu_info()
        if info.vmem_capacity_bytes <= 64 * 1024 * 1024:   # v7x-class (64 MiB/TC)
            return 5 * 1024 * 1024
    except Exception:
        pass
    return 4 * 1024 * 1024


def _residual_2d(x2, y2, itemsize):
    """Pallas add over a lane-dense (rows, lw) view; lw is a multiple of 128."""
    rows, lw = x2.shape
    dtype = x2.dtype

    # Row-tile alignment matches dtype packing (8 f32 / 16 bf16 / 32 int8 rows).
    pack = max(1, 4 // itemsize)
    align = 8 * pack

    target = _target_tile_bytes()
    tr = max(align, (target // (lw * itemsize)) // align * align)

    if tr >= rows:
        if rows > align:
            # Split into (at least) 2 tiles so the "parallel" axis can be
            # sharded across v7x's 2 TensorCores; neutral on v5e/v6e.
            half = pl.cdiv(rows, 2)
            tr = pl.cdiv(half, align) * align
        else:
            tr = rows  # single tiny block; block dim == full dim is legal

    grid_rows = pl.cdiv(rows, tr)  # ragged final block handled by Pallas
    n = rows * lw

    spec = pl.BlockSpec((tr, lw), lambda i: (i, 0))
    return pl.pallas_call(
        _add_kernel,
        out_shape=jax.ShapeDtypeStruct((rows, lw), dtype),
        grid=(grid_rows,),
        in_specs=[spec, spec],
        out_specs=spec,
        compiler_params=pltpu.CompilerParams(
            dimension_semantics=("parallel",),
            vmem_limit_bytes=_VMEM_LIMIT_BYTES,
        ),
        cost_estimate=pl.CostEstimate(
            flops=n, bytes_accessed=3 * n * itemsize, transcendentals=0),
        # TODO(synk): add input_output_aliases={0: 0} once callers donate x.
    )(x2, y2)


def residual(x, y):
    """Computes x + y with a Pallas TPU kernel. x, y: same shape and dtype."""
    assert x.shape == y.shape and x.dtype == y.dtype
    itemsize = jnp.dtype(x.dtype).itemsize
    n = x.size

    # Tiny activations: launch overhead dominates; let XLA fuse it.
    if n * itemsize < _SMALL_BYPASS_BYTES:
        return x + y

    xf = x.reshape(-1)
    yf = y.reshape(-1)

    lw = _choose_lane_width(n)
    if lw == 0:
        # n not divisible by 128: kernel on the 128-aligned prefix, tiny XLA
        # add on the <128-element tail (no whole-array padding).
        main = (n // _LANE) * _LANE
        lw = _choose_lane_width(main)
        out_main = _residual_2d(
            xf[:main].reshape(-1, lw), yf[:main].reshape(-1, lw), itemsize)
        tail = xf[main:] + yf[main:]
        return jnp.concatenate([out_main.reshape(-1), tail]).reshape(x.shape)

    out2 = _residual_2d(xf.reshape(-1, lw), yf.reshape(-1, lw), itemsize)
    return out2.reshape(x.shape)


class Residual:
    """JAX mirror of the PyTorch Residual module (no parameters)."""

    def __init__(self, embedding_dim):
        self.embedding_dim = embedding_dim  # unused, matches PyTorch __init__

    def __call__(self, x, y):
        return residual(x, y)


if __name__ == "__main__":
    key = jax.random.PRNGKey(0)

    def _check(shape, dtype, k):
        kx, ky = jax.random.split(k)
        a = jax.random.normal(kx, shape, dtype=jnp.float32).astype(dtype)
        b = jax.random.normal(ky, shape, dtype=jnp.float32).astype(dtype)
        out = jax.block_until_ready(residual(a, b))
        ref = a + b
        assert out.shape == ref.shape and out.dtype == ref.dtype
        assert jnp.array_equal(out, ref)

    keys = jax.random.split(key, 5)

    # 1) Small module-consistent shape [batch, seq, hidden] -> XLA bypass path.
    mod = Residual(embedding_dim=32)
    kx, ky = jax.random.split(keys[0])
    x = jax.random.normal(kx, (2, 8, 32), dtype=jnp.float32)
    y = jax.random.normal(ky, (2, 8, 32), dtype=jnp.float32)
    out = jax.block_until_ready(mod(x, y))
    assert jnp.array_equal(out, x + y)

    # 2) Kernel path, fully aligned, 2-way parallel grid.
    _check((8, 128, 256), jnp.float32, keys[1])

    # 3) Kernel path with a ragged final row block (rows % tr != 0, no padding).
    _check((2, 200, 640), jnp.float32, keys[2])

    # 4) Kernel path with a non-128-divisible tail handled by a tiny XLA add.
    _check((129, 1001), jnp.float32, keys[3])

    # 5) bf16 path (16-row sublane packing alignment).
    _check((4, 256, 512), jnp.bfloat16, keys[4])

    print("KERNEL_OK")
</pallas_src>

<mosaic_0001>
module attributes {stable_mosaic.version = 11 : i64} {
  func.func @_add_kernel(%arg0: i32, %arg1: memref<64x2048xf32, #tpu.memory_space<vmem>>, %arg2: memref<64x2048xf32, #tpu.memory_space<vmem>>, %arg3: memref<64x2048xf32, #tpu.memory_space<vmem>>) attributes {dimension_semantics = [#tpu.dimension_semantics<parallel>], iteration_bounds = array<i64: 2>, scalar_prefetch = 0 : i64, scratch_operands = 0 : i64, tpu.core_type = #tpu.core_type<tc>, window_params = [{transform_indices = @transform_0, window_bounds = array<i64: 64, 2048>}, {transform_indices = @transform_1, window_bounds = array<i64: 64, 2048>}, {transform_indices = @transform_2, window_bounds = array<i64: 64, 2048>}]} {
    %c0 = arith.constant 0 : index
    %c0_0 = arith.constant 0 : index
    %0 = vector.load %arg1[%c0, %c0_0] : memref<64x2048xf32, #tpu.memory_space<vmem>>, vector<64x2048xf32>
    %c0_1 = arith.constant 0 : index
    %c0_2 = arith.constant 0 : index
    %1 = vector.load %arg2[%c0_1, %c0_2] : memref<64x2048xf32, #tpu.memory_space<vmem>>, vector<64x2048xf32>
    %2 = arith.addf %0, %1 : vector<64x2048xf32>
    %c0_3 = arith.constant 0 : index
    %c0_4 = arith.constant 0 : index
    %3 = vector.load %arg3[%c0_3, %c0_4] : memref<64x2048xf32, #tpu.memory_space<vmem>>, vector<64x2048xf32>
    tpu.vector_store %arg3[%c0_3, %c0_4], %2 {strides = array<i32>} : memref<64x2048xf32, #tpu.memory_space<vmem>>, vector<64x2048xf32>,
    return
  }
  func.func @transform_0(%arg0: i32) -> (i32, i32) {
    %c0_i32 = arith.constant 0 : i32
    %c0_i32_0 = arith.constant 0 : i32
    return %arg0, %c0_i32 : i32, i32
  }
  func.func @transform_1(%arg0: i32) -> (i32, i32) {
    %c0_i32 = arith.constant 0 : i32
    %c0_i32_0 = arith.constant 0 : i32
    return %arg0, %c0_i32 : i32, i32
  }
  func.func @transform_2(%arg0: i32) -> (i32, i32) {
    %c0_i32 = arith.constant 0 : i32
    %c0_i32_0 = arith.constant 0 : i32
    return %arg0, %c0_i32 : i32, i32
  }
}

</mosaic_0001>

<llo_original>
// kernel: tpu_custom_call.1
$region0: #{tpu_custom_call.1}
  #allocation0 [shape = 'u32[]', space=smem, size = 0x4, offset = 0x4, fixed_abs, tag = 'smem constant byte address 0x4 - core index']
  #allocation1 [shape = 'u32[144,128]{1,0:T(1,128)}', space=vmem, size = 0x12000, scoped, tag = 'internal scratch']
  %s0 = inlined_call_operand.hbm [shape: f32[128,2048], index: 0, kind: input, shape index: {}]
  %s1 = inlined_call_operand.hbm [shape: f32[128,2048], index: 1, kind: input, shape index: {}]
  %s2 = inlined_call_operand.hbm [shape: f32[128,2048], index: 2, kind: output, shape index: {}]
  %s3 = sld [smem:[#allocation0]]
  $region49: #{tpu_custom_call.1} parent=0
    _
  %s5 = ssub.s32 1, %s3
  %s6 = scalar_select 0, %s5, %s3
  $region1: #{tpu_custom_call.1} parent=0
    #allocation2 [shape = 'u8[1048576]{0}', space=vmem, size = 0x100000, scoped, tag = 'input window, operand 0']
    #allocation3 [shape = 's32[2]{0}', space=sflag, size = 0x8, scoped, tag = 'scoped memory for tpu_custom_call.1']
    #allocation4 [shape = 's32[2]{0}', space=sflag, size = 0x8, scoped, tag = 'scoped memory for tpu_custom_call.1']
    #allocation5 [shape = 'u8[1048576]{0}', space=vmem, size = 0x100000, scoped, tag = 'input window, operand 1']
    #allocation6 [shape = 's32[2]{0}', space=sflag, size = 0x8, scoped, tag = 'scoped memory for tpu_custom_call.1']
    #allocation7 [shape = 'u8[1048576]{0}', space=vmem, size = 0x100000, scoped, tag = 'output window, operand 0']
    %7 = vsyncpa [#allocation3], 0
    %s8 = scalar_lea.sflag [#allocation3], 1
    %9 = vsyncpa %s8, 0
    %10 = vsyncpa [#allocation6], 0
    %s11 = scalar_lea.sflag [#allocation6], 1
    %12 = vsyncpa %s11, 0
    %13 = vsyncpa [#allocation4], 0
    %s14 = scalar_lea.sflag [#allocation4], 1
    %15 = vsyncpa %s14, 0
    loop: start=0, step=1, limit=4
    $region2: #{tpu_custom_call.1} parent=1 // loop_pre_header
      _
    $region3: #{tpu_custom_call.1} parent=1 // loop_header
      %s17 = sphi 0, %s21
      %p18 = scmp.ge.s32.totalorder %s17, 4
      %s27 = sphi 0, %s29
      %s30 = sphi 0, %s27
      %s31 = sphi 0, %s30
      %s47 = sphi 0, %s31
      %s53 = sphi 0, %s55
      %s56 = sphi 0, %s53
      %s57 = sphi 0, %s56
      %s73 = sphi 0, %s57
      %s79 = sphi 0, %s81
      %s82 = sphi 0, %s79
      %s83 = sphi 0, %s82
      %s99 = sphi 0, %s83
    $region4: #{tpu_custom_call.1} parent=1 // loop_header_branch
      %20 = sbr.rel (%p18) target = $region8
    $region5: #{tpu_custom_call.1} parent=1 // loop_body
      %s22 = ssub.s32 %s17, 1
      %s23 = ssub.s32 %s17, 2
      %s24 = sadd.s32 %s17, 1
      %s25 = ssub.s32 %s17, %s24
      %p26 = scmp.eq.s32.totalorder %s25, 0
      %s28 = sadd.s32 %s27, 1
      %s29 = scalar_select %p26, %s27, %s28
      %p32 = pneg %p26
      %p33 = scmp.eq.s32.totalorder %s17, 1
      %p34 = por %p32, %p33
      %p35 = scmp.ne.s32.totalorder %s27, %s30
      %p36 = scmp.eq.s32.totalorder %s17, 0
      %p37 = por %p35, %p36
      %p38 = scmp.ne.s32.totalorder %s27, %s30
      %p39 = scmp.eq.s32.totalorder %s22, 1
      %p40 = por %p38, %p39
      %p41 = scmp.ne.s32.totalorder %s30, %s31
      %p42 = scmp.eq.s32.totalorder %s22, 0
      %p43 = por %p41, %p42
      %p44 = scmp.ne.s32.totalorder %s30, %s31
      %p45 = scmp.eq.s32.totalorder %s23, 1
      %p46 = por %p44, %p45
      %p48 = scmp.ne.s32.totalorder %s31, %s47
      %p49 = scmp.eq.s32.totalorder %s23, 0
      %p50 = por %p48, %p49
      %s51 = ssub.s32 %s17, %s24
      %p52 = scmp.eq.s32.totalorder %s51, 0
      %s54 = sadd.s32 %s53, 1
      %s55 = scalar_select %p52, %s53, %s54
      %p58 = pneg %p52
      %p59 = scmp.eq.s32.totalorder %s17, 1
      %p60 = por %p58, %p59
      %p61 = scmp.ne.s32.totalorder %s53, %s56
      %p62 = scmp.eq.s32.totalorder %s17, 0
      %p63 = por %p61, %p62
      %p64 = scmp.ne.s32.totalorder %s53, %s56
      %p65 = scmp.eq.s32.totalorder %s22, 1
      %p66 = por %p64, %p65
      %p67 = scmp.ne.s32.totalorder %s56, %s57
      %p68 = scmp.eq.s32.totalorder %s22, 0
      %p69 = por %p67, %p68
      %p70 = scmp.ne.s32.totalorder %s56, %s57
      %p71 = scmp.eq.s32.totalorder %s23, 1
      %p72 = por %p70, %p71
      %p74 = scmp.ne.s32.totalorder %s57, %s73
      %p75 = scmp.eq.s32.totalorder %s23, 0
      %p76 = por %p74, %p75
      %s77 = ssub.s32 %s17, %s24
      %p78 = scmp.eq.s32.totalorder %s77, 0
      %s80 = sadd.s32 %s79, 1
      %s81 = scalar_select %p78, %s79, %s80
      %p84 = pneg %p78
      %p85 = scmp.eq.s32.totalorder %s17, 1
      %p86 = por %p84, %p85
      %p87 = scmp.ne.s32.totalorder %s79, %s82
      %p88 = scmp.eq.s32.totalorder %s17, 0
      %p89 = por %p87, %p88
      %p90 = scmp.ne.s32.totalorder %s79, %s82
      %p91 = scmp.eq.s32.totalorder %s22, 1
      %p92 = por %p90, %p91
      %p93 = scmp.ne.s32.totalorder %s82, %s83
      %p94 = scmp.eq.s32.totalorder %s22, 0
      %p95 = por %p93, %p94
      %p96 = scmp.ne.s32.totalorder %s82, %s83
      %p97 = scmp.eq.s32.totalorder %s23, 1
      %p98 = por %p96, %p97
      %p100 = scmp.ne.s32.totalorder %s83, %s99
      %p101 = scmp.eq.s32.totalorder %s23, 0
      %p102 = por %p100, %p101
      %p103 = scmp.le.s32.totalorder 1, %s17
      %p104 = scmp.lt.s32.totalorder %s17, 3
      %p105 = pnand %p103, %p104
      %p106 = pneg %p105
      // Predicated region
      $region9: #{tpu_custom_call.1} parent=5 // pred_check
        _
      $region10: #{tpu_custom_call.1} parent=5 // pred_check_branch
        %108 = sbr.rel (%p105) target = $region12
      $region11: #{tpu_custom_call.1} parent=5 // pred_region
        %s109 = ssub.s32 %s17, 1
      $region12: #{tpu_custom_call.1} parent=5 // pred_fallthru
        _
      %p110 = scmp.lt.s32.totalorder %s17, 2
      // Predicated region
      $region13: #{tpu_custom_call.1} parent=5 // pred_check
        %p111 = pneg %p110
      $region14: #{tpu_custom_call.1} parent=5 // pred_check_branch
        %113 = sbr.rel (%p111) target = $region16
      $region15: #{tpu_custom_call.1} parent=5 // pred_region
        // Predicated region
        $region17: #{tpu_custom_call.1} parent=15 // pred_check
          %p114 = pneg %p37
        $region18: #{tpu_custom_call.1} parent=15 // pred_check_branch
          %116 = sbr.rel (%p114) target = $region20
        $region19: #{tpu_custom_call.1} parent=15 // pred_region
          %s117 = sand.u32 %s27, 1
          %s118 = scalar_lea.sflag [#allocation3], %s117
          %s119 = sand.u32 %s27, 1
          %s120 = smul.addr %s119, 1024
          %s121 = scalar_lea.vmem [#allocation2], %s120
          %s122 = smul.u32 8, %s17
          %s124 = ssub.s32 16384, 16384
          %125 = vsyncadd %s118, %s124
          %s126 = smul.addr %s122, 16
          %s127 = smul.addr %s126, 128
          %s128 = scalar_lea.hbm %s0, %s127
          %s129 = sshll.u32 %s121, 4
          %s130 = int_to_ptr.vmem [resolvable:$true] %s129
          %135 = dma.hbm_to_vmem [thread:$0]  %s128, 16384, %s130, %s118, 2048, 2048, 128
        $region20: #{tpu_custom_call.1} parent=15 // pred_fallthru
          _
        // Predicated region
        $region21: #{tpu_custom_call.1} parent=15 // pred_check
          %p136 = pneg %p63
        $region22: #{tpu_custom_call.1} parent=15 // pred_check_branch
          %138 = sbr.rel (%p136) target = $region24
        $region23: #{tpu_custom_call.1} parent=15 // pred_region
          %s139 = sand.u32 %s53, 1
          %s140 = scalar_lea.sflag [#allocation6], %s139
          %s141 = sand.u32 %s53, 1
          %s142 = smul.addr %s141, 1024
          %s143 = scalar_lea.vmem [#allocation5], %s142
          %s144 = smul.u32 8, %s17
          %s146 = ssub.s32 16384, 16384
          %147 = vsyncadd %s140, %s146
          %s148 = smul.addr %s144, 16
          %s149 = smul.addr %s148, 128
          %s150 = scalar_lea.hbm %s1, %s149
          %s151 = sshll.u32 %s143, 4
          %s152 = int_to_ptr.vmem [resolvable:$true] %s151
          %157 = dma.hbm_to_vmem [thread:$0]  %s150, 16384, %s152, %s140, 2048, 2048, 128
        $region24: #{tpu_custom_call.1} parent=15 // pred_fallthru
          _
      $region16: #{tpu_custom_call.1} parent=5 // pred_fallthru
        _
      %p158 = scmp.le.s32.totalorder 1, %s17
      %p159 = scmp.lt.s32.totalorder %s17, 3
      %p160 = pnand %p158, %p159
      %p161 = pneg %p160
      // Predicated region
      $region25: #{tpu_custom_call.1} parent=5 // pred_check
        _
      $region26: #{tpu_custom_call.1} parent=5 // pred_check_branch
        %163 = sbr.rel (%p160) target = $region28
      $region27: #{tpu_custom_call.1} parent=5 // pred_region
        %s164 = ssub.s32 %s17, 1
        %s165 = sand.u32 %s30, 1
        %s166 = scalar_lea.sflag [#allocation3], %s165
        %s167 = sand.u32 %s30, 1
        %s168 = smul.addr %s167, 1024
        %s169 = scalar_lea.vmem [#allocation2], %s168
        // Predicated region
        $region29: #{tpu_custom_call.1} parent=27 // pred_check
          %p170 = pneg %p43
        $region30: #{tpu_custom_call.1} parent=27 // pred_check_branch
          %172 = sbr.rel (%p170) target = $region32
        $region31: #{tpu_custom_call.1} parent=27 // pred_region
          %173 = dma.done %s166, 16384
        $region32: #{tpu_custom_call.1} parent=27 // pred_fallthru
          _
        %s174 = sand.u32 %s56, 1
        %s175 = scalar_lea.sflag [#allocation6], %s174
        %s176 = sand.u32 %s56, 1
        %s177 = smul.addr %s176, 1024
        %s178 = scalar_lea.vmem [#allocation5], %s177
        // Predicated region
        $region33: #{tpu_custom_call.1} parent=27 // pred_check
          %p179 = pneg %p69
        $region34: #{tpu_custom_call.1} parent=27 // pred_check_branch
          %181 = sbr.rel (%p179) target = $region36
        $region35: #{tpu_custom_call.1} parent=27 // pred_region
          %182 = dma.done %s175, 16384
        $region36: #{tpu_custom_call.1} parent=27 // pred_fallthru
          _
        %s183 = sand.u32 %s30, 1
        %s184 = scalar_lea.sflag [#allocation3], %s183
        %s185 = sand.u32 %s30, 1
        %s186 = smul.addr %s185, 1024
        %s187 = scalar_lea.vmem [#allocation2], %s186
        %p188 = pneg %p43
        %p189 = pneg %p40
        %s190 = sand.u32 %s56, 1
        %s191 = scalar_lea.sflag [#allocation6], %s190
        %s192 = sand.u32 %s56, 1
        %s193 = smul.addr %s192, 1024
        %s194 = scalar_lea.vmem [#allocation5], %s193
        %p195 = pneg %p69
        %p196 = pneg %p66
        %p197 = pneg %p95
        %p198 = pneg %p92
        %s199 = sand.u32 %s82, 1
        %s200 = scalar_lea.sflag [#allocation4], %s199
        %s201 = sand.u32 %s82, 1
        %s202 = smul.addr %s201, 1024
        %s203 = scalar_lea.vmem [#allocation7], %s202
        %s204 = smul.u32 8, %s22
        %s205 = smul.u32 8, %s22
        %s206 = smul.u32 8, %s22
        %v207 = vld [vmem:[%s169] sm:$0xff]
        %v208 = vld [vmem:[%s169 + $0x8] sm:$0xff]
        %v209 = vld [vmem:[%s169 + $0x10] sm:$0xff]
        %v210 = vld [vmem:[%s169 + $0x18] sm:$0xff]
        %v211 = vld [vmem:[%s169 + $0x20] sm:$0xff]
        %v212 = vld [vmem:[%s169 + $0x28] sm:$0xff]
        %v213 = vld [vmem:[%s169 + $0x30] sm:$0xff]
        %v214 = vld [vmem:[%s169 + $0x38] sm:$0xff]
        %v215 = vld [vmem:[%s169 + $0x40] sm:$0xff]
        %v216 = vld [vmem:[%s169 + $0x48] sm:$0xff]
        %v217 = vld [vmem:[%s169 + $0x50] sm:$0xff]
        %v218 = vld [vmem:[%s169 + $0x58] sm:$0xff]
        %v219 = vld [vmem:[%s169 + $0x60] sm:$0xff]
        %v220 = vld [vmem:[%s169 + $0x68] sm:$0xff]
        %v221 = vld [vmem:[%s169 + $0x70] sm:$0xff]
        %v222 = vld [vmem:[%s169 + $0x78] sm:$0xff]
        %v223 = vld [vmem:[%s169 + $0x80] sm:$0xff]
        %v224 = vld [vmem:[%s169 + $0x88] sm:$0xff]
        %v225 = vld [vmem:[%s169 + $0x90] sm:$0xff]
        %v226 = vld [vmem:[%s169 + $0x98] sm:$0xff]
        %v227 = vld [vmem:[%s169 + $0xa0] sm:$0xff]
        %v228 = vld [vmem:[%s169 + $0xa8] sm:$0xff]
        %v229 = vld [vmem:[%s169 + $0xb0] sm:$0xff]
        %v230 = vld [vmem:[%s169 + $0xb8] sm:$0xff]
        %v231 = vld [vmem:[%s169 + $0xc0] sm:$0xff]
        %v232 = vld [vmem:[%s169 + $0xc8] sm:$0xff]
        %v233 = vld [vmem:[%s169 + $0xd0] sm:$0xff]
        %v234 = vld [vmem:[%s169 + $0xd8] sm:$0xff]
        %v235 = vld [vmem:[%s169 + $0xe0] sm:$0xff]
        %v236 = vld [vmem:[%s169 + $0xe8] sm:$0xff]
        %v237 = vld [vmem:[%s169 + $0xf0] sm:$0xff]
        %v238 = vld [vmem:[%s169 + $0xf8] sm:$0xff]
        %v239 = vld [vmem:[%s169 + $0x100] sm:$0xff]
        %v240 = vld [vmem:[%s169 + $0x108] sm:$0xff]
        %v241 = vld [vmem:[%s169 + $0x110] sm:$0xff]
        %v242 = vld [vmem:[%s169 + $0x118] sm:$0xff]
        %v243 = vld [vmem:[%s169 + $0x120] sm:$0xff]
        %v244 = vld [vmem:[%s169 + $0x128] sm:$0xff]
        %v245 = vld [vmem:[%s169 + $0x130] sm:$0xff]
        %v246 = vld [vmem:[%s169 + $0x138] sm:$0xff]
        %v247 = vld [vmem:[%s169 + $0x140] sm:$0xff]
        %v248 = vld [vmem:[%s169 + $0x148] sm:$0xff]
        %v249 = vld [vmem:[%s169 + $0x150] sm:$0xff]
        %v250 = vld [vmem:[%s169 + $0x158] sm:$0xff]
        %v251 = vld [vmem:[%s169 + $0x160] sm:$0xff]
        %v252 = vld [vmem:[%s169 + $0x168] sm:$0xff]
        %v253 = vld [vmem:[%s169 + $0x170] sm:$0xff]
        %v254 = vld [vmem:[%s169 + $0x178] sm:$0xff]
        %v255 = vld [vmem:[%s169 + $0x180] sm:$0xff]
        %v256 = vld [vmem:[%s169 + $0x188] sm:$0xff]
        %v257 = vld [vmem:[%s169 + $0x190] sm:$0xff]
        %v258 = vld [vmem:[%s169 + $0x198] sm:$0xff]
        %v259 = vld [vmem:[%s169 + $0x1a0] sm:$0xff]
        %v260 = vld [vmem:[%s169 + $0x1a8] sm:$0xff]
        %v261 = vld [vmem:[%s169 + $0x1b0] sm:$0xff]
        %v262 = vld [vmem:[%s169 + $0x1b8] sm:$0xff]
        %v263 = vld [vmem:[%s169 + $0x1c0] sm:$0xff]
        %v264 = vld [vmem:[%s169 + $0x1c8] sm:$0xff]
        %v265 = vld [vmem:[%s169 + $0x1d0] sm:$0xff]
        %v266 = vld [vmem:[%s169 + $0x1d8] sm:$0xff]
        %v267 = vld [vmem:[%s169 + $0x1e0] sm:$0xff]
        %v268 = vld [vmem:[%s169 + $0x1e8] sm:$0xff]
        %v269 = vld [vmem:[%s169 + $0x1f0] sm:$0xff]
        %v270 = vld [vmem:[%s169 + $0x1f8] sm:$0xff]
        %v271 = vld [vmem:[%s169 + $0x200] sm:$0xff]
        %v272 = vld [vmem:[%s169 + $0x208] sm:$0xff]
        %v273 = vld [vmem:[%s169 + $0x210] sm:$0xff]
        %v274 = vld [vmem:[%s169 + $0x218] sm:$0xff]
        %v275 = vld [vmem:[%s169 + $0x220] sm:$0xff]
        %v276 = vld [vmem:[%s169 + $0x228] sm:$0xff]
        %v277 = vld [vmem:[%s169 + $0x230] sm:$0xff]
        %v278 = vld [vmem:[%s169 + $0x238] sm:$0xff]
        %v279 = vld [vmem:[%s169 + $0x240] sm:$0xff]
        %v280 = vld [vmem:[%s169 + $0x248] sm:$0xff]
        %v281 = vld [vmem:[%s169 + $0x250] sm:$0xff]
        %v282 = vld [vmem:[%s169 + $0x258] sm:$0xff]
        %v283 = vld [vmem:[%s169 + $0x260] sm:$0xff]
        %v284 = vld [vmem:[%s169 + $0x268] sm:$0xff]
        %v285 = vld [vmem:[%s169 + $0x270] sm:$0xff]
        %v286 = vld [vmem:[%s169 + $0x278] sm:$0xff]
        %v287 = vld [vmem:[%s169 + $0x280] sm:$0xff]
        %v288 = vld [vmem:[%s169 + $0x288] sm:$0xff]
        %v289 = vld [vmem:[%s169 + $0x290] sm:$0xff]
        %v290 = vld [vmem:[%s169 + $0x298] sm:$0xff]
        %v291 = vld [vmem:[%s169 + $0x2a0] sm:$0xff]
        %v292 = vld [vmem:[%s169 + $0x2a8] sm:$0xff]
        %v293 = vld [vmem:[%s169 + $0x2b0] sm:$0xff]
        %v294 = vld [vmem:[%s169 + $0x2b8] sm:$0xff]
        %v295 = vld [vmem:[%s169 + $0x2c0] sm:$0xff]
        %v296 = vld [vmem:[%s169 + $0x2c8] sm:$0xff]
        %v297 = vld [vmem:[%s169 + $0x2d0] sm:$0xff]
        %v298 = vld [vmem:[%s169 + $0x2d8] sm:$0xff]
        %v299 = vld [vmem:[%s169 + $0x2e0] sm:$0xff]
        %v300 = vld [vmem:[%s169 + $0x2e8] sm:$0xff]
        %v301 = vld [vmem:[%s169 + $0x2f0] sm:$0xff]
        %v302 = vld [vmem:[%s169 + $0x2f8] sm:$0xff]
        %v303 = vld [vmem:[%s169 + $0x300] sm:$0xff]
        %v304 = vld [vmem:[%s169 + $0x308] sm:$0xff]
        %v305 = vld [vmem:[%s169 + $0x310] sm:$0xff]
        %v306 = vld [vmem:[%s169 + $0x318] sm:$0xff]
        %v307 = vld [vmem:[%s169 + $0x320] sm:$0xff]
        %v308 = vld [vmem:[%s169 + $0x328] sm:$0xff]
        %v309 = vld [vmem:[%s169 + $0x330] sm:$0xff]
        %v310 = vld [vmem:[%s169 + $0x338] sm:$0xff]
        %v311 = vld [vmem:[%s169 + $0x340] sm:$0xff]
        %v312 = vld [vmem:[%s169 + $0x348] sm:$0xff]
        %v313 = vld [vmem:[%s169 + $0x350] sm:$0xff]
        %v314 = vld [vmem:[%s169 + $0x358] sm:$0xff]
        %v315 = vld [vmem:[%s169 + $0x360] sm:$0xff]
        %v316 = vld [vmem:[%s169 + $0x368] sm:$0xff]
        %v317 = vld [vmem:[%s169 + $0x370] sm:$0xff]
        %v318 = vld [vmem:[%s169 + $0x378] sm:$0xff]
        %v319 = vld [vmem:[%s169 + $0x380] sm:$0xff]
        %v320 = vld [vmem:[%s169 + $0x388] sm:$0xff]
        %v321 = vld [vmem:[%s169 + $0x390] sm:$0xff]
        %v322 = vld [vmem:[%s169 + $0x398] sm:$0xff]
        %v323 = vld [vmem:[%s169 + $0x3a0] sm:$0xff]
        %v324 = vld [vmem:[%s169 + $0x3a8] sm:$0xff]
        %v325 = vld [vmem:[%s169 + $0x3b0] sm:$0xff]
        %v326 = vld [vmem:[%s169 + $0x3b8] sm:$0xff]
        %v327 = vld [vmem:[%s169 + $0x3c0] sm:$0xff]
        %v328 = vld [vmem:[%s169 + $0x3c8] sm:$0xff]
        %v329 = vld [vmem:[%s169 + $0x3d0] sm:$0xff]
        %v330 = vld [vmem:[%s169 + $0x3d8] sm:$0xff]
        %v331 = vld [vmem:[%s169 + $0x3e0] sm:$0xff]
        %v332 = vld [vmem:[%s169 + $0x3e8] sm:$0xff]
        %v333 = vld [vmem:[%s169 + $0x3f0] sm:$0xff]
        %v334 = vld [vmem:[%s169 + $0x3f8] sm:$0xff]
        %v335 = vld [vmem:[%s178] sm:$0xff]
        %v336 = vld [vmem:[%s178 + $0x8] sm:$0xff]
        %v337 = vld [vmem:[%s178 + $0x10] sm:$0xff]
        %v338 = vld [vmem:[%s178 + $0x18] sm:$0xff]
        %v339 = vld [vmem:[%s178 + $0x20] sm:$0xff]
        %v340 = vld [vmem:[%s178 + $0x28] sm:$0xff]
        %v341 = vld [vmem:[%s178 + $0x30] sm:$0xff]
        %v342 = vld [vmem:[%s178 + $0x38] sm:$0xff]
        %v343 = vld [vmem:[%s178 + $0x40] sm:$0xff]
        %v344 = vld [vmem:[%s178 + $0x48] sm:$0xff]
        %v345 = vld [vmem:[%s178 + $0x50] sm:$0xff]
        %v346 = vld [vmem:[%s178 + $0x58] sm:$0xff]
        %v347 = vld [vmem:[%s178 + $0x60] sm:$0xff]
        %v348 = vld [vmem:[%s178 + $0x68] sm:$0xff]
        %v349 = vld [vmem:[%s178 + $0x70] sm:$0xff]
        %v350 = vld [vmem:[%s178 + $0x78] sm:$0xff]
        %v351 = vld [vmem:[%s178 + $0x80] sm:$0xff]
        %v352 = vld [vmem:[%s178 + $0x88] sm:$0xff]
        %v353 = vld [vmem:[%s178 + $0x90] sm:$0xff]
        %v354 = vld [vmem:[%s178 + $0x98] sm:$0xff]
        %v355 = vld [vmem:[%s178 + $0xa0] sm:$0xff]
        %v356 = vld [vmem:[%s178 + $0xa8] sm:$0xff]
        %v357 = vld [vmem:[%s178 + $0xb0] sm:$0xff]
        %v358 = vld [vmem:[%s178 + $0xb8] sm:$0xff]
        %v359 = vld [vmem:[%s178 + $0xc0] sm:$0xff]
        %v360 = vld [vmem:[%s178 + $0xc8] sm:$0xff]
        %v361 = vld [vmem:[%s178 + $0xd0] sm:$0xff]
        %v362 = vld [vmem:[%s178 + $0xd8] sm:$0xff]
        %v363 = vld [vmem:[%s178 + $0xe0] sm:$0xff]
        %v364 = vld [vmem:[%s178 + $0xe8] sm:$0xff]
        %v365 = vld [vmem:[%s178 + $0xf0] sm:$0xff]
        %v366 = vld [vmem:[%s178 + $0xf8] sm:$0xff]
        %v367 = vld [vmem:[%s178 + $0x100] sm:$0xff]
        %v368 = vld [vmem:[%s178 + $0x108] sm:$0xff]
        %v369 = vld [vmem:[%s178 + $0x110] sm:$0xff]
        %v370 = vld [vmem:[%s178 + $0x118] sm:$0xff]
        %v371 = vld [vmem:[%s178 + $0x120] sm:$0xff]
        %v372 = vld [vmem:[%s178 + $0x128] sm:$0xff]
        %v373 = vld [vmem:[%s178 + $0x130] sm:$0xff]
        %v374 = vld [vmem:[%s178 + $0x138] sm:$0xff]
        %v375 = vld [vmem:[%s178 + $0x140] sm:$0xff]
        %v376 = vld [vmem:[%s178 + $0x148] sm:$0xff]
        %v377 = vld [vmem:[%s178 + $0x150] sm:$0xff]
        %v378 = vld [vmem:[%s178 + $0x158] sm:$0xff]
        %v379 = vld [vmem:[%s178 + $0x160] sm:$0xff]
        %v380 = vld [vmem:[%s178 + $0x168] sm:$0xff]
        %v381 = vld [vmem:[%s178 + $0x170] sm:$0xff]
        %v382 = vld [vmem:[%s178 + $0x178] sm:$0xff]
        %v383 = vld [vmem:[%s178 + $0x180] sm:$0xff]
        %v384 = vld [vmem:[%s178 + $0x188] sm:$0xff]
        %v385 = vld [vmem:[%s178 + $0x190] sm:$0xff]
        %v386 = vld [vmem:[%s178 + $0x198] sm:$0xff]
        %v387 = vld [vmem:[%s178 + $0x1a0] sm:$0xff]
        %v388 = vld [vmem:[%s178 + $0x1a8] sm:$0xff]
        %v389 = vld [vmem:[%s178 + $0x1b0] sm:$0xff]
        %v390 = vld [vmem:[%s178 + $0x1b8] sm:$0xff]
        %v391 = vld [vmem:[%s178 + $0x1c0] sm:$0xff]
        %v392 = vld [vmem:[%s178 + $0x1c8] sm:$0xff]
        %v393 = vld [vmem:[%s178 + $0x1d0] sm:$0xff]
        %v394 = vld [vmem:[%s178 + $0x1d8] sm:$0xff]
        %v395 = vld [vmem:[%s178 + $0x1e0] sm:$0xff]
        %v396 = vld [vmem:[%s178 + $0x1e8] sm:$0xff]
        %v397 = vld [vmem:[%s178 + $0x1f0] sm:$0xff]
        %v398 = vld [vmem:[%s178 + $0x1f8] sm:$0xff]
        %v399 = vld [vmem:[%s178 + $0x200] sm:$0xff]
        %v400 = vld [vmem:[%s178 + $0x208] sm:$0xff]
        %v401 = vld [vmem:[%s178 + $0x210] sm:$0xff]
        %v402 = vld [vmem:[%s178 + $0x218] sm:$0xff]
        %v403 = vld [vmem:[%s178 + $0x220] sm:$0xff]
        %v404 = vld [vmem:[%s178 + $0x228] sm:$0xff]
        %v405 = vld [vmem:[%s178 + $0x230] sm:$0xff]
        %v406 = vld [vmem:[%s178 + $0x238] sm:$0xff]
        %v407 = vld [vmem:[%s178 + $0x240] sm:$0xff]
        %v408 = vld [vmem:[%s178 + $0x248] sm:$0xff]
        %v409 = vld [vmem:[%s178 + $0x250] sm:$0xff]
        %v410 = vld [vmem:[%s178 + $0x258] sm:$0xff]
        %v411 = vld [vmem:[%s178 + $0x260] sm:$0xff]
        %v412 = vld [vmem:[%s178 + $0x268] sm:$0xff]
        %v413 = vld [vmem:[%s178 + $0x270] sm:$0xff]
        %v414 = vld [vmem:[%s178 + $0x278] sm:$0xff]
        %v415 = vld [vmem:[%s178 + $0x280] sm:$0xff]
        %v416 = vld [vmem:[%s178 + $0x288] sm:$0xff]
        %v417 = vld [vmem:[%s178 + $0x290] sm:$0xff]
        %v418 = vld [vmem:[%s178 + $0x298] sm:$0xff]
        %v419 = vld [vmem:[%s178 + $0x2a0] sm:$0xff]
        %v420 = vld [vmem:[%s178 + $0x2a8] sm:$0xff]
        %v421 = vld [vmem:[%s178 + $0x2b0] sm:$0xff]
        %v422 = vld [vmem:[%s178 + $0x2b8] sm:$0xff]
        %v423 = vld [vmem:[%s178 + $0x2c0] sm:$0xff]
        %v424 = vld [vmem:[%s178 + $0x2c8] sm:$0xff]
        %v425 = vld [vmem:[%s178 + $0x2d0] sm:$0xff]
        %v426 = vld [vmem:[%s178 + $0x2d8] sm:$0xff]
        %v427 = vld [vmem:[%s178 + $0x2e0] sm:$0xff]
        %v428 = vld [vmem:[%s178 + $0x2e8] sm:$0xff]
        %v429 = vld [vmem:[%s178 + $0x2f0] sm:$0xff]
        %v430 = vld [vmem:[%s178 + $0x2f8] sm:$0xff]
        %v431 = vld [vmem:[%s178 + $0x300] sm:$0xff]
        %v432 = vld [vmem:[%s178 + $0x308] sm:$0xff]
        %v433 = vld [vmem:[%s178 + $0x310] sm:$0xff]
        %v434 = vld [vmem:[%s178 + $0x318] sm:$0xff]
        %v435 = vld [vmem:[%s178 + $0x320] sm:$0xff]
        %v436 = vld [vmem:[%s178 + $0x328] sm:$0xff]
        %v437 = vld [vmem:[%s178 + $0x330] sm:$0xff]
        %v438 = vld [vmem:[%s178 + $0x338] sm:$0xff]
        %v439 = vld [vmem:[%s178 + $0x340] sm:$0xff]
        %v440 = vld [vmem:[%s178 + $0x348] sm:$0xff]
        %v441 = vld [vmem:[%s178 + $0x350] sm:$0xff]
        %v442 = vld [vmem:[%s178 + $0x358] sm:$0xff]
        %v443 = vld [vmem:[%s178 + $0x360] sm:$0xff]
        %v444 = vld [vmem:[%s178 + $0x368] sm:$0xff]
        %v445 = vld [vmem:[%s178 + $0x370] sm:$0xff]
        %v446 = vld [vmem:[%s178 + $0x378] sm:$0xff]
        %v447 = vld [vmem:[%s178 + $0x380] sm:$0xff]
        %v448 = vld [vmem:[%s178 + $0x388] sm:$0xff]
        %v449 = vld [vmem:[%s178 + $0x390] sm:$0xff]
        %v450 = vld [vmem:[%s178 + $0x398] sm:$0xff]
        %v451 = vld [vmem:[%s178 + $0x3a0] sm:$0xff]
        %v452 = vld [vmem:[%s178 + $0x3a8] sm:$0xff]
        %v453 = vld [vmem:[%s178 + $0x3b0] sm:$0xff]
        %v454 = vld [vmem:[%s178 + $0x3b8] sm:$0xff]
        %v455 = vld [vmem:[%s178 + $0x3c0] sm:$0xff]
        %v456 = vld [vmem:[%s178 + $0x3c8] sm:$0xff]
        %v457 = vld [vmem:[%s178 + $0x3d0] sm:$0xff]
        %v458 = vld [vmem:[%s178 + $0x3d8] sm:$0xff]
        %v459 = vld [vmem:[%s178 + $0x3e0] sm:$0xff]
        %v460 = vld [vmem:[%s178 + $0x3e8] sm:$0xff]
        %v461 = vld [vmem:[%s178 + $0x3f0] sm:$0xff]
        %v462 = vld [vmem:[%s178 + $0x3f8] sm:$0xff]
        %v463 = vadd.f32 %v207, %v335
        %v464 = vadd.f32 %v208, %v336
        %v465 = vadd.f32 %v209, %v337
        %v466 = vadd.f32 %v210, %v338
        %v467 = vadd.f32 %v211, %v339
        %v468 = vadd.f32 %v212, %v340
        %v469 = vadd.f32 %v213, %v341
        %v470 = vadd.f32 %v214, %v342
        %v471 = vadd.f32 %v215, %v343
        %v472 = vadd.f32 %v216, %v344
        %v473 = vadd.f32 %v217, %v345
        %v474 = vadd.f32 %v218, %v346
        %v475 = vadd.f32 %v219, %v347
        %v476 = vadd.f32 %v220, %v348
        %v477 = vadd.f32 %v221, %v349
        %v478 = vadd.f32 %v222, %v350
        %v479 = vadd.f32 %v223, %v351
        %v480 = vadd.f32 %v224, %v352
        %v481 = vadd.f32 %v225, %v353
        %v482 = vadd.f32 %v226, %v354
        %v483 = vadd.f32 %v227, %v355
        %v484 = vadd.f32 %v228, %v356
        %v485 = vadd.f32 %v229, %v357
        %v486 = vadd.f32 %v230, %v358
        %v487 = vadd.f32 %v231, %v359
        %v488 = vadd.f32 %v232, %v360
        %v489 = vadd.f32 %v233, %v361
        %v490 = vadd.f32 %v234, %v362
        %v491 = vadd.f32 %v235, %v363
        %v492 = vadd.f32 %v236, %v364
        %v493 = vadd.f32 %v237, %v365
        %v494 = vadd.f32 %v238, %v366
        %v495 = vadd.f32 %v239, %v367
        %v496 = vadd.f32 %v240, %v368
        %v497 = vadd.f32 %v241, %v369
        %v498 = vadd.f32 %v242, %v370
        %v499 = vadd.f32 %v243, %v371
        %v500 = vadd.f32 %v244, %v372
        %v501 = vadd.f32 %v245, %v373
        %v502 = vadd.f32 %v246, %v374
        %v503 = vadd.f32 %v247, %v375
        %v504 = vadd.f32 %v248, %v376
        %v505 = vadd.f32 %v249, %v377
        %v506 = vadd.f32 %v250, %v378
        %v507 = vadd.f32 %v251, %v379
        %v508 = vadd.f32 %v252, %v380
        %v509 = vadd.f32 %v253, %v381
        %v510 = vadd.f32 %v254, %v382
        %v511 = vadd.f32 %v255, %v383
        %v512 = vadd.f32 %v256, %v384
        %v513 = vadd.f32 %v257, %v385
        %v514 = vadd.f32 %v258, %v386
        %v515 = vadd.f32 %v259, %v387
        %v516 = vadd.f32 %v260, %v388
        %v517 = vadd.f32 %v261, %v389
        %v518 = vadd.f32 %v262, %v390
        %v519 = vadd.f32 %v263, %v391
        %v520 = vadd.f32 %v264, %v392
        %v521 = vadd.f32 %v265, %v393
        %v522 = vadd.f32 %v266, %v394
        %v523 = vadd.f32 %v267, %v395
        %v524 = vadd.f32 %v268, %v396
        %v525 = vadd.f32 %v269, %v397
        %v526 = vadd.f32 %v270, %v398
        %v527 = vadd.f32 %v271, %v399
        %v528 = vadd.f32 %v272, %v400
        %v529 = vadd.f32 %v273, %v401
        %v530 = vadd.f32 %v274, %v402
        %v531 = vadd.f32 %v275, %v403
        %v532 = vadd.f32 %v276, %v404
        %v533 = vadd.f32 %v277, %v405
        %v534 = vadd.f32 %v278, %v406
        %v535 = vadd.f32 %v279, %v407
        %v536 = vadd.f32 %v280, %v408
        %v537 = vadd.f32 %v281, %v409
        %v538 = vadd.f32 %v282, %v410
        %v539 = vadd.f32 %v283, %v411
        %v540 = vadd.f32 %v284, %v412
        %v541 = vadd.f32 %v285, %v413
        %v542 = vadd.f32 %v286, %v414
        %v543 = vadd.f32 %v287, %v415
        %v544 = vadd.f32 %v288, %v416
        %v545 = vadd.f32 %v289, %v417
        %v546 = vadd.f32 %v290, %v418
        %v547 = vadd.f32 %v291, %v419
        %v548 = vadd.f32 %v292, %v420
        %v549 = vadd.f32 %v293, %v421
        %v550 = vadd.f32 %v294, %v422
        %v551 = vadd.f32 %v295, %v423
        %v552 = vadd.f32 %v296, %v424
        %v553 = vadd.f32 %v297, %v425
        %v554 = vadd.f32 %v298, %v426
        %v555 = vadd.f32 %v299, %v427
        %v556 = vadd.f32 %v300, %v428
        %v557 = vadd.f32 %v301, %v429
        %v558 = vadd.f32 %v302, %v430
        %v559 = vadd.f32 %v303, %v431
        %v560 = vadd.f32 %v304, %v432
        %v561 = vadd.f32 %v305, %v433
        %v562 = vadd.f32 %v306, %v434
        %v563 = vadd.f32 %v307, %v435
        %v564 = vadd.f32 %v308, %v436
        %v565 = vadd.f32 %v309, %v437
        %v566 = vadd.f32 %v310, %v438
        %v567 = vadd.f32 %v311, %v439
        %v568 = vadd.f32 %v312, %v440
        %v569 = vadd.f32 %v313, %v441
        %v570 = vadd.f32 %v314, %v442
        %v571 = vadd.f32 %v315, %v443
        %v572 = vadd.f32 %v316, %v444
        %v573 = vadd.f32 %v317, %v445
        %v574 = vadd.f32 %v318, %v446
        %v575 = vadd.f32 %v319, %v447
        %v576 = vadd.f32 %v320, %v448
        %v577 = vadd.f32 %v321, %v449
        %v578 = vadd.f32 %v322, %v450
        %v579 = vadd.f32 %v323, %v451
        %v580 = vadd.f32 %v324, %v452
        %v581 = vadd.f32 %v325, %v453
        %v582 = vadd.f32 %v326, %v454
        %v583 = vadd.f32 %v327, %v455
        %v584 = vadd.f32 %v328, %v456
        %v585 = vadd.f32 %v329, %v457
        %v586 = vadd.f32 %v330, %v458
        %v587 = vadd.f32 %v331, %v459
        %v588 = vadd.f32 %v332, %v460
        %v589 = vadd.f32 %v333, %v461
        %v590 = vadd.f32 %v334, %v462
        %591 = vst [vmem:[%s203] sm:$0xff] %v463
        %592 = vst [vmem:[%s203 + $0x8] sm:$0xff] %v464
        %593 = vst [vmem:[%s203 + $0x10] sm:$0xff] %v465
        %594 = vst [vmem:[%s203 + $0x18] sm:$0xff] %v466
        %595 = vst [vmem:[%s203 + $0x20] sm:$0xff] %v467
        %596 = vst [vmem:[%s203 + $0x28] sm:$0xff] %v468
        %597 = vst [vmem:[%s203 + $0x30] sm:$0xff] %v469
        %598 = vst [vmem:[%s203 + $0x38] sm:$0xff] %v470
        %599 = vst [vmem:[%s203 + $0x40] sm:$0xff] %v471
        %600 = vst [vmem:[%s203 + $0x48] sm:$0xff] %v472
        %601 = vst [vmem:[%s203 + $0x50] sm:$0xff] %v473
        %602 = vst [vmem:[%s203 + $0x58] sm:$0xff] %v474
        %603 = vst [vmem:[%s203 + $0x60] sm:$0xff] %v475
        %604 = vst [vmem:[%s203 + $0x68] sm:$0xff] %v476
        %605 = vst [vmem:[%s203 + $0x70] sm:$0xff] %v477
        %606 = vst [vmem:[%s203 + $0x78] sm:$0xff] %v478
        %607 = vst [vmem:[%s203 + $0x80] sm:$0xff] %v479
        %608 = vst [vmem:[%s203 + $0x88] sm:$0xff] %v480
        %609 = vst [vmem:[%s203 + $0x90] sm:$0xff] %v481
        %610 = vst [vmem:[%s203 + $0x98] sm:$0xff] %v482
        %611 = vst [vmem:[%s203 + $0xa0] sm:$0xff] %v483
        %612 = vst [vmem:[%s203 + $0xa8] sm:$0xff] %v484
        %613 = vst [vmem:[%s203 + $0xb0] sm:$0xff] %v485
        %614 = vst [vmem:[%s203 + $0xb8] sm:$0xff] %v486
        %615 = vst [vmem:[%s203 + $0xc0] sm:$0xff] %v487
        %616 = vst [vmem:[%s203 + $0xc8] sm:$0xff] %v488
        %617 = vst [vmem:[%s203 + $0xd0] sm:$0xff] %v489
        %618 = vst [vmem:[%s203 + $0xd8] sm:$0xff] %v490
        %619 = vst [vmem:[%s203 + $0xe0] sm:$0xff] %v491
        %620 = vst [vmem:[%s203 + $0xe8] sm:$0xff] %v492
        %621 = vst [vmem:[%s203 + $0xf0] sm:$0xff] %v493
        %622 = vst [vmem:[%s203 + $0xf8] sm:$0xff] %v494
        %623 = vst [vmem:[%s203 + $0x100] sm:$0xff] %v495
        %624 = vst [vmem:[%s203 + $0x108] sm:$0xff] %v496
        %625 = vst [vmem:[%s203 + $0x110] sm:$0xff] %v497
        %626 = vst [vmem:[%s203 + $0x118] sm:$0xff] %v498
        %627 = vst [vmem:[%s203 + $0x120] sm:$0xff] %v499
        %628 = vst [vmem:[%s203 + $0x128] sm:$0xff] %v500
        %629 = vst [vmem:[%s203 + $0x130] sm:$0xff] %v501
        %630 = vst [vmem:[%s203 + $0x138] sm:$0xff] %v502
        %631 = vst [vmem:[%s203 + $0x140] sm:$0xff] %v503
        %632 = vst [vmem:[%s203 + $0x148] sm:$0xff] %v504
        %633 = vst [vmem:[%s203 + $0x150] sm:$0xff] %v505
        %634 = vst [vmem:[%s203 + $0x158] sm:$0xff] %v506
        %635 = vst [vmem:[%s203 + $0x160] sm:$0xff] %v507
        %636 = vst [vmem:[%s203 + $0x168] sm:$0xff] %v508
        %637 = vst [vmem:[%s203 + $0x170] sm:$0xff] %v509
        %638 = vst [vmem:[%s203 + $0x178] sm:$0xff] %v510
        %639 = vst [vmem:[%s203 + $0x180] sm:$0xff] %v511
        %640 = vst [vmem:[%s203 + $0x188] sm:$0xff] %v512
        %641 = vst [vmem:[%s203 + $0x190] sm:$0xff] %v513
        %642 = vst [vmem:[%s203 + $0x198] sm:$0xff] %v514
        %643 = vst [vmem:[%s203 + $0x1a0] sm:$0xff] %v515
        %644 = vst [vmem:[%s203 + $0x1a8] sm:$0xff] %v516
        %645 = vst [vmem:[%s203 + $0x1b0] sm:$0xff] %v517
        %646 = vst [vmem:[%s203 + $0x1b8] sm:$0xff] %v518
        %647 = vst [vmem:[%s203 + $0x1c0] sm:$0xff] %v519
        %648 = vst [vmem:[%s203 + $0x1c8] sm:$0xff] %v520
        %649 = vst [vmem:[%s203 + $0x1d0] sm:$0xff] %v521
        %650 = vst [vmem:[%s203 + $0x1d8] sm:$0xff] %v522
        %651 = vst [vmem:[%s203 + $0x1e0] sm:$0xff] %v523
        %652 = vst [vmem:[%s203 + $0x1e8] sm:$0xff] %v524
        %653 = vst [vmem:[%s203 + $0x1f0] sm:$0xff] %v525
        %654 = vst [vmem:[%s203 + $0x1f8] sm:$0xff] %v526
        %655 = vst [vmem:[%s203 + $0x200] sm:$0xff] %v527
        %656 = vst [vmem:[%s203 + $0x208] sm:$0xff] %v528
        %657 = vst [vmem:[%s203 + $0x210] sm:$0xff] %v529
        %658 = vst [vmem:[%s203 + $0x218] sm:$0xff] %v530
        %659 = vst [vmem:[%s203 + $0x220] sm:$0xff] %v531
        %660 = vst [vmem:[%s203 + $0x228] sm:$0xff] %v532
        %661 = vst [vmem:[%s203 + $0x230] sm:$0xff] %v533
        %662 = vst [vmem:[%s203 + $0x238] sm:$0xff] %v534
        %663 = vst [vmem:[%s203 + $0x240] sm:$0xff] %v535
        %664 = vst [vmem:[%s203 + $0x248] sm:$0xff] %v536
        %665 = vst [vmem:[%s203 + $0x250] sm:$0xff] %v537
        %666 = vst [vmem:[%s203 + $0x258] sm:$0xff] %v538
        %667 = vst [vmem:[%s203 + $0x260] sm:$0xff] %v539
        %668 = vst [vmem:[%s203 + $0x268] sm:$0xff] %v540
        %669 = vst [vmem:[%s203 + $0x270] sm:$0xff] %v541
        %670 = vst [vmem:[%s203 + $0x278] sm:$0xff] %v542
        %671 = vst [vmem:[%s203 + $0x280] sm:$0xff] %v543
        %672 = vst [vmem:[%s203 + $0x288] sm:$0xff] %v544
        %673 = vst [vmem:[%s203 + $0x290] sm:$0xff] %v545
        %674 = vst [vmem:[%s203 + $0x298] sm:$0xff] %v546
        %675 = vst [vmem:[%s203 + $0x2a0] sm:$0xff] %v547
        %676 = vst [vmem:[%s203 + $0x2a8] sm:$0xff] %v548
        %677 = vst [vmem:[%s203 + $0x2b0] sm:$0xff] %v549
        %678 = vst [vmem:[%s203 + $0x2b8] sm:$0xff] %v550
        %679 = vst [vmem:[%s203 + $0x2c0] sm:$0xff] %v551
        %680 = vst [vmem:[%s203 + $0x2c8] sm:$0xff] %v552
        %681 = vst [vmem:[%s203 + $0x2d0] sm:$0xff] %v553
        %682 = vst [vmem:[%s203 + $0x2d8] sm:$0xff] %v554
        %683 = vst [vmem:[%s203 + $0x2e0] sm:$0xff] %v555
        %684 = vst [vmem:[%s203 + $0x2e8] sm:$0xff] %v556
        %685 = vst [vmem:[%s203 + $0x2f0] sm:$0xff] %v557
        %686 = vst [vmem:[%s203 + $0x2f8] sm:$0xff] %v558
        %687 = vst [vmem:[%s203 + $0x300] sm:$0xff] %v559
        %688 = vst [vmem:[%s203 + $0x308] sm:$0xff] %v560
        %689 = vst [vmem:[%s203 + $0x310] sm:$0xff] %v561
        %690 = vst [vmem:[%s203 + $0x318] sm:$0xff] %v562
        %691 = vst [vmem:[%s203 + $0x320] sm:$0xff] %v563
        %692 = vst [vmem:[%s203 + $0x328] sm:$0xff] %v564
        %693 = vst [vmem:[%s203 + $0x330] sm:$0xff] %v565
        %694 = vst [vmem:[%s203 + $0x338] sm:$0xff] %v566
        %695 = vst [vmem:[%s203 + $0x340] sm:$0xff] %v567
        %696 = vst [vmem:[%s203 + $0x348] sm:$0xff] %v568
        %697 = vst [vmem:[%s203 + $0x350] sm:$0xff] %v569
        %698 = vst [vmem:[%s203 + $0x358] sm:$0xff] %v570
        %699 = vst [vmem:[%s203 + $0x360] sm:$0xff] %v571
        %700 = vst [vmem:[%s203 + $0x368] sm:$0xff] %v572
        %701 = vst [vmem:[%s203 + $0x370] sm:$0xff] %v573
        %702 = vst [vmem:[%s203 + $0x378] sm:$0xff] %v574
        %703 = vst [vmem:[%s203 + $0x380] sm:$0xff] %v575
        %704 = vst [vmem:[%s203 + $0x388] sm:$0xff] %v576
        %705 = vst [vmem:[%s203 + $0x390] sm:$0xff] %v577
        %706 = vst [vmem:[%s203 + $0x398] sm:$0xff] %v578
        %707 = vst [vmem:[%s203 + $0x3a0] sm:$0xff] %v579
        %708 = vst [vmem:[%s203 + $0x3a8] sm:$0xff] %v580
        %709 = vst [vmem:[%s203 + $0x3b0] sm:$0xff] %v581
        %710 = vst [vmem:[%s203 + $0x3b8] sm:$0xff] %v582
        %711 = vst [vmem:[%s203 + $0x3c0] sm:$0xff] %v583
        %712 = vst [vmem:[%s203 + $0x3c8] sm:$0xff] %v584
        %713 = vst [vmem:[%s203 + $0x3d0] sm:$0xff] %v585
        %714 = vst [vmem:[%s203 + $0x3d8] sm:$0xff] %v586
        %715 = vst [vmem:[%s203 + $0x3e0] sm:$0xff] %v587
        %716 = vst [vmem:[%s203 + $0x3e8] sm:$0xff] %v588
        %717 = vst [vmem:[%s203 + $0x3f0] sm:$0xff] %v589
        %718 = vst [vmem:[%s203 + $0x3f8] sm:$0xff] %v590
        %s719 = sand.u32 %s82, 1
        %s720 = scalar_lea.sflag [#allocation4], %s719
        %s721 = sand.u32 %s82, 1
        %s722 = smul.addr %s721, 1024
        %s723 = scalar_lea.vmem [#allocation7], %s722
        // Predicated region
        $region37: #{tpu_custom_call.1} parent=27 // pred_check
          %p724 = pneg %p92
        $region38: #{tpu_custom_call.1} parent=27 // pred_check_branch
          %726 = sbr.rel (%p724) target = $region40
        $region39: #{tpu_custom_call.1} parent=27 // pred_region
          %s727 = smul.u32 8, %s22
          %s729 = ssub.s32 16384, 16384
          %730 = vsyncadd %s720, %s729
          %s731 = smul.addr %s727, 16
          %s732 = smul.addr %s731, 128
          %s733 = scalar_lea.hbm %s2, %s732
          %s734 = sshll.u32 %s723, 4
          %s735 = int_to_ptr.vmem [resolvable:$true] %s734
          %740 = dma.vmem_to_hbm [thread:$0]  %s735, 16384, %s733, %s720, 2048, 2048, 128
        $region40: #{tpu_custom_call.1} parent=27 // pred_fallthru
          _
      $region28: #{tpu_custom_call.1} parent=5 // pred_fallthru
        _
      %p741 = scmp.le.s32.totalorder 2, %s17
      // Predicated region
      $region41: #{tpu_custom_call.1} parent=5 // pred_check
        %p742 = pneg %p741
      $region42: #{tpu_custom_call.1} parent=5 // pred_check_branch
        %744 = sbr.rel (%p742) target = $region44
      $region43: #{tpu_custom_call.1} parent=5 // pred_region
        %s745 = ssub.s32 %s17, 2
        // Predicated region
        $region45: #{tpu_custom_call.1} parent=43 // pred_check
          %p746 = pneg %p98
        $region46: #{tpu_custom_call.1} parent=43 // pred_check_branch
          %748 = sbr.rel (%p746) target = $region48
        $region47: #{tpu_custom_call.1} parent=43 // pred_region
          %s749 = sand.u32 %s83, 1
          %s750 = scalar_lea.sflag [#allocation4], %s749
          %s751 = sand.u32 %s83, 1
          %s752 = smul.addr %s751, 1024
          %s753 = scalar_lea.vmem [#allocation7], %s752
          %754 = dma.done %s750, 16384
        $region48: #{tpu_custom_call.1} parent=43 // pred_fallthru
          _
      $region44: #{tpu_custom_call.1} parent=5 // pred_fallthru
        _
    $region6: #{tpu_custom_call.1} parent=1 // loop_footer
      %s21 = sadd.s32 1, %s17
    $region7: #{tpu_custom_call.1} parent=1 // loop_footer_branch
      %16 = sbr.rel target = $region3
    $region8: #{tpu_custom_call.1} parent=1 // loop_exit
      _
    %755 = vsyncpa [#allocation3], 1
    %s756 = scalar_lea.sflag [#allocation3], 1
    %757 = vsyncpa %s756, 1
    %758 = vsyncpa [#allocation6], 1
    %s759 = scalar_lea.sflag [#allocation6], 1
    %760 = vsyncpa %s759, 1
    %761 = vsyncpa [#allocation4], 1
    %s762 = scalar_lea.sflag [#allocation4], 1
    %763 = vsyncpa %s762, 1

</llo_original>
